<compile_context>
chip_gen: v5e
topology: v5e:2x2
jax: 0.10.0
libtpu: 0.0.40
codegen_flags: <defaults>
</compile_context>

<pallas_src>
import functools

import jax
import jax.numpy as jnp
from jax.experimental import pallas as pl
from jax.experimental.pallas import tpu as pltpu


def _mymodel_kernel(w_ref, x_ref, o_ref):
    # Single fused contraction:  o^T_tile = Wc @ x^T_tile,  Wc = w2 @ w1  (4x4).
    o = jnp.dot(w_ref[...], x_ref[...], preferred_element_type=jnp.float32)

    is_first = pl.program_id(0) == 0

    @pl.when(is_first)
    def _():
        # `out[0] = 0` in the original (N, F) layout is column 0 of the
        # transposed output; only the first N-tile contains global token 0.
        col = jax.lax.broadcasted_iota(jnp.int32, o.shape, 1)
        o_ref[...] = jnp.where(col == 0, 0.0, o).astype(o_ref.dtype)

    @pl.when(jnp.logical_not(is_first))
    def _():
        o_ref[...] = o.astype(o_ref.dtype)


def _choose_tile_n(n: int) -> int:
    # Lane-dense tiles (multiples of 128) that evenly divide N; otherwise fall
    # back to a single full-extent block (always legal since it equals the dim).
    for t in (2048, 1024, 512, 256, 128):
        if n % t == 0:
            return t
    return n


@functools.partial(jax.jit, static_argnames=())
def mymodel_forward(x, w1, w2):
    """x: (N, 4) float32. w1, w2: (4, 4) PyTorch Linear weights (out_f, in_f)."""
    n, f_in = x.shape
    f_out = w2.shape[0]

    # Fuse the two linears into one 4x4 weight (done once, outside the kernel).
    wc = (w2 @ w1).astype(jnp.float32)          # (f_out, f_in)
    x_t = x.T                                    # (f_in, N): N on the lane axis

    tile_n = _choose_tile_n(n)
    grid = (n // tile_n,)

    out_t = pl.pallas_call(
        _mymodel_kernel,
        out_shape=jax.ShapeDtypeStruct((f_out, n), x.dtype),
        grid=grid,
        in_specs=[
            pl.BlockSpec((f_out, f_in), lambda i: (0, 0)),   # fused 4x4 weight
            pl.BlockSpec((f_in, tile_n), lambda i: (0, i)),  # x^T column tile
        ],
        out_specs=pl.BlockSpec((f_out, tile_n), lambda i: (0, i)),
        compiler_params=pltpu.CompilerParams(
            dimension_semantics=("parallel",)),              # shards across TCs on v7x
    )(wc, x_t)

    return out_t.T                                           # back to (N, f_out)


if __name__ == "__main__":
    key = jax.random.PRNGKey(0)
    kx, k1, k2 = jax.random.split(key, 3)

    # Small shapes consistent with the module: seq = 8, features = 4.
    x = jax.random.normal(kx, (8, 4), dtype=jnp.float32)
    # PyTorch Linear layout (out_features, in_features).
    w1 = jax.random.normal(k1, (4, 4), dtype=jnp.float32) * 0.5
    w2 = jax.random.normal(k2, (4, 4), dtype=jnp.float32) * 0.5

    out = mymodel_forward(x, w1, w2)
    out = jax.block_until_ready(out)

    # Pure-JAX reference of the exact PyTorch semantics.
    ref = x @ w1.T
    ref = ref.at[0].set(0.0)
    ref = ref @ w2.T
    assert jnp.allclose(out, ref, atol=1e-5, rtol=1e-5), "mismatch vs reference"

    print("KERNEL_OK")
</pallas_src>

<mosaic_0001>
module attributes {stable_mosaic.version = 11 : i64} {
  func.func @_mymodel_kernel(%arg0: i32, %arg1: memref<4x4xf32, #tpu.memory_space<vmem>>, %arg2: memref<4x8xf32, #tpu.memory_space<vmem>>, %arg3: memref<4x8xf32, #tpu.memory_space<vmem>>) attributes {dimension_semantics = [#tpu.dimension_semantics<parallel>], iteration_bounds = array<i64: 1>, scalar_prefetch = 0 : i64, scratch_operands = 0 : i64, tpu.core_type = #tpu.core_type<tc>, window_params = [{pipeline_mode = #tpu.pipeline_mode<synchronous>, transform_indices = @transform_0, window_bounds = array<i64: 4, 4>}, {transform_indices = @transform_1, window_bounds = array<i64: 4, 8>}, {transform_indices = @transform_2, window_bounds = array<i64: 4, 8>}]} {
    %c0 = arith.constant 0 : index
    %c0_0 = arith.constant 0 : index
    %0 = vector.load %arg1[%c0, %c0_0] : memref<4x4xf32, #tpu.memory_space<vmem>>, vector<4x4xf32>
    %c0_1 = arith.constant 0 : index
    %c0_2 = arith.constant 0 : index
    %1 = vector.load %arg2[%c0_1, %c0_2] : memref<4x8xf32, #tpu.memory_space<vmem>>, vector<4x8xf32>
    %cst = arith.constant dense<0.000000e+00> : vector<4x8xf32>
    %2 = tpu.matmul %0, %1, %cst {dimension_numbers = #tpu.dot_dimension_numbers<[1], [0], [0], [1], [0, 0, 1, 1], [], []>} : vector<4x4xf32>, vector<4x8xf32>, vector<4x8xf32> -> vector<4x8xf32>
    %c0_i32 = arith.constant 0 : i32
    %3 = arith.cmpi eq, %arg0, %c0_i32 : i32
    %4 = arith.extui %3 : i1 to i32
    %c0_i32_3 = arith.constant 0 : i32
    %5 = arith.cmpi ne, %4, %c0_i32_3 : i32
    scf.if %5 {
      %9 = tpu.iota {dimensions = array<i32: 1>} : vector<4x8xi32>
      %c0_i32_5 = arith.constant 0 : i32
      %10 = vector.broadcast %c0_i32_5 : i32 to vector<4x8xi32>
      %11 = arith.cmpi eq, %9, %10 : vector<4x8xi32>
      %cst_6 = arith.constant 0.000000e+00 : f32
      %12 = vector.broadcast %cst_6 : f32 to vector<4x8xf32>
      %13 = arith.select %11, %12, %2 : vector<4x8xi1>, vector<4x8xf32>
      %c0_7 = arith.constant 0 : index
      %c0_8 = arith.constant 0 : index
      %14 = vector.load %arg3[%c0_7, %c0_8] : memref<4x8xf32, #tpu.memory_space<vmem>>, vector<4x8xf32>
      tpu.vector_store %arg3[%c0_7, %c0_8], %13 {strides = array<i32>} : memref<4x8xf32, #tpu.memory_space<vmem>>, vector<4x8xf32>,
    } else {
    }
    %true = arith.constant true
    %6 = arith.xori %3, %true : i1
    %7 = arith.extui %6 : i1 to i32
    %c0_i32_4 = arith.constant 0 : i32
    %8 = arith.cmpi ne, %7, %c0_i32_4 : i32
    scf.if %8 {
      %c0_5 = arith.constant 0 : index
      %c0_6 = arith.constant 0 : index
      %9 = vector.load %arg3[%c0_5, %c0_6] : memref<4x8xf32, #tpu.memory_space<vmem>>, vector<4x8xf32>
      tpu.vector_store %arg3[%c0_5, %c0_6], %2 {strides = array<i32>} : memref<4x8xf32, #tpu.memory_space<vmem>>, vector<4x8xf32>,
    } else {
    }
    return
  }
  func.func @transform_0(%arg0: i32) -> (i32, i32) {
    %c0_i32 = arith.constant 0 : i32
    %c0_i32_0 = arith.constant 0 : i32
    %c0_i32_1 = arith.constant 0 : i32
    return %c0_i32, %c0_i32_0 : i32, i32
  }
  func.func @transform_1(%arg0: i32) -> (i32, i32) {
    %c0_i32 = arith.constant 0 : i32
    %c0_i32_0 = arith.constant 0 : i32
    return %c0_i32, %arg0 : i32, i32
  }
  func.func @transform_2(%arg0: i32) -> (i32, i32) {
    %c0_i32 = arith.constant 0 : i32
    %c0_i32_0 = arith.constant 0 : i32
    return %c0_i32, %arg0 : i32, i32
  }
}

</mosaic_0001>

<llo_original>
// kernel: mymodel_forward.1
$region0: #{mymodel_forward.1}
  #allocation0 [shape = 'u32[]', space=smem, size = 0x4, offset = 0x4, fixed_abs, tag = 'smem constant byte address 0x4 - core index']
  #allocation1 [shape = 'u32[72,128]{1,0:T(1,128)}', space=vmem, size = 0x9000, scoped, tag = 'internal scratch']
  %s0 = inlined_call_operand.vmem [shape: f32[4,4], index: 0, kind: input, shape index: {}]
  %s1 = inlined_call_operand.vmem [shape: f32[4,8], index: 1, kind: input, shape index: {}]
  %s2 = inlined_call_operand.hbm [shape: f32[4,8], index: 2, kind: output, shape index: {}]
  %s3 = sld [smem:[#allocation0]]
  $region26: #{mymodel_forward.1} parent=0
    _
  %s5 = ssub.s32 1, %s3
  %s6 = scalar_select 0, %s5, %s3
  $region1: #{mymodel_forward.1} parent=0
    #allocation2 [shape = 'u8[2048]{0}', space=vmem, size = 0x800, scoped, tag = 'output window, operand 0, single buffered']
    #allocation3 [shape = 's32[1]{0}', space=sflag, size = 0x4, scoped, tag = 'scoped memory for mymodel_forward.1']
    %7 = vsyncpa [#allocation3], 0
    // Predicated region
    $region2: #{mymodel_forward.1} parent=1 // pred_check
      _
    $region3: #{mymodel_forward.1} parent=1 // pred_check_branch
      %9 = sbr.rel (0) target = $region5
    $region4: #{mymodel_forward.1} parent=1 // pred_region
      _
    $region5: #{mymodel_forward.1} parent=1 // pred_fallthru
      _
    // Predicated region
    $region6: #{mymodel_forward.1} parent=1 // pred_check
      _
    $region7: #{mymodel_forward.1} parent=1 // pred_check_branch
      %11 = sbr.rel (0) target = $region9
    $region8: #{mymodel_forward.1} parent=1 // pred_region
      _
    $region9: #{mymodel_forward.1} parent=1 // pred_fallthru
      _
    %v12 = vld [vmem:[%s0] sm:$0xf]
    %v13 = vld [vmem:[%s1] sm:$0xf]
    %vm14 = vcmask 31744
    %v16 = vsel %vm14, %v12, 0
    %vm18 = vcmask 1043456
    %v20 = vsel %vm18, %v13, 0
    %22 = vmatpush.msra.mxu0 0.0
    %23 = vmatpush.msra.mxu0 0.0
    %24 = vmatpush.msra.mxu0 0.0
    %25 = vmatpush.msra.mxu0 0.0
    %26 = vmatpush.msra.mxu0 0.0
    %27 = vmatpush.msra.mxu0 0.0
    %28 = vmatpush.msra.mxu0 0.0
    %29 = vmatpush.msra.mxu0 0.0
    %30 = vmatpush.msra.mxu0 0.0
    %31 = vmatpush.msra.mxu0 0.0
    %32 = vmatpush.msra.mxu0 0.0
    %33 = vmatpush.msra.mxu0 0.0
    %34 = vmatpush.msra.mxu0 0.0
    %35 = vmatpush.msra.mxu0 0.0
    %36 = vmatpush.msra.mxu0 0.0
    %37 = vmatpush.msra.mxu0 %v20
    %38 = vmatmul.f32.gmra.mxu0 %v16
    %v39 = vpop.f32.mrf.mxu0
    %v40 = vadd.f32 0.0, %v39
    %41 = vdwg.mxu0
    %p42 = scmp.eq.s32.totalorder 0, 0
    // Predicated region
    $region10: #{mymodel_forward.1} parent=1 // pred_check
      %p43 = pneg %p42
    $region11: #{mymodel_forward.1} parent=1 // pred_check_branch
      %45 = sbr.rel (%p43) target = $region13
    $region12: #{mymodel_forward.1} parent=1 // pred_region
      %v46 = vlaneseq
      %v47 = vand.u32 %v46, 127
      %vm48 = vcmp.eq.s32.totalorder %v47, 0
      %v49 = vsel %vm48, 0.0, %v40
      %vm50 = vcmask 60416
      %51 = vst.msk [vmem:[#allocation2] sm:$0xf] %vm50, %v49
    $region13: #{mymodel_forward.1} parent=1 // pred_fallthru
      _
    %p52 = scmp.ne.s32.totalorder 0, 0
    // Predicated region
    $region14: #{mymodel_forward.1} parent=1 // pred_check
      %p53 = pneg %p52
    $region15: #{mymodel_forward.1} parent=1 // pred_check_branch
      %55 = sbr.rel (%p53) target = $region17
    $region16: #{mymodel_forward.1} parent=1 // pred_region
      %vm56 = vcmask 60416
      %57 = vst.msk [vmem:[#allocation2] sm:$0xf] %vm56, %v40
    $region17: #{mymodel_forward.1} parent=1 // pred_fallthru
      _
    // Predicated region
    $region18: #{mymodel_forward.1} parent=1 // pred_check
      _
    $region19: #{mymodel_forward.1} parent=1 // pred_check_branch
      %59 = sbr.rel (0) target = $region21
    $region20: #{mymodel_forward.1} parent=1 // pred_region
      %61 = vsyncadd [#allocation3], 0
      %s63 = sshll.u32 [#allocation2], 4
      %s64 = int_to_ptr.vmem [resolvable:$true] %s63
      %s65 = sshll.u32 %s2, 4
      %s66 = int_to_ptr.hbm [resolvable:$true] %s65
      %68 = dma.vmem_to_hbm [thread:$0]  %s64, 64, %s66, [#allocation3]
    $region21: #{mymodel_forward.1} parent=1 // pred_fallthru
      _
    // Predicated region
    $region22: #{mymodel_forward.1} parent=1 // pred_check
      _
    $region23: #{mymodel_forward.1} parent=1 // pred_check_branch
      %70 = sbr.rel (0) target = $region25
    $region24: #{mymodel_forward.1} parent=1 // pred_region
      %72 = dma.done [#allocation3], 64
    $region25: #{mymodel_forward.1} parent=1 // pred_fallthru
      _
    %73 = vsyncpa [#allocation3], 1

</llo_original>
